<compile_context>
chip_gen: v5e
topology: v5e:2x2
jax: 0.10.0
libtpu: 0.0.40
codegen_flags: <defaults>
</compile_context>

<pallas_src>
import functools

import jax
import jax.numpy as jnp
from jax.experimental import pallas as pl
from jax.experimental.pallas import tpu as pltpu


def _round_up(x: int, m: int) -> int:
    return (x + m - 1) // m * m


def _physical_vmem_bytes() -> int:
    try:
        return int(pltpu.get_tpu_info().vmem_capacity_bytes)
    except Exception:
        return 64 * 1024 * 1024  # conservative (v7x per-TC size)


def _data_embeddings_kernel(x_ref, w_ref, pos_ref, o_ref):
    # x_ref:   (bb, tn, K_pad)  bf16 patch rows (row 0 of the sequence is the
    #                           zero "class patch"; padded rows are zero)
    # w_ref:   (K_pad, D_pad)   bf16 conv weight, reshaped + transposed
    # pos_ref: (tn, D_pad)      bf16 positional table tile
    #                           (row 0 = class_emb + pos[0]; patch rows have the
    #                            conv bias folded in)
    # o_ref:   (bb, tn, D_pad)  streamed output tile
    bb, tn, k_pad = x_ref.shape
    d_pad = o_ref.shape[-1]

    # Merge the batch block into the MXU M dimension (tn is a multiple of 8,
    # k_pad a multiple of 128, so the collapse is tile-safe).
    x = x_ref[...].reshape(bb * tn, k_pad)
    emb = jnp.dot(x, w_ref[...], preferred_element_type=jnp.float32)

    pos = pos_ref[...].astype(jnp.float32)          # bf16 DMA, f32 VPU add
    emb = emb.reshape(bb, tn, d_pad) + pos[None, :, :]
    o_ref[...] = emb.astype(o_ref.dtype)


@functools.partial(jax.jit, static_argnames=("patch_size", "out_dtype", "trim"))
def data_embeddings(x_nchw, conv_w, conv_b, class_emb, pos_emb, *,
                    patch_size, out_dtype=jnp.float32, trim=True):
    """Pallas implementation of DataEmbeddings.forward.

    x_nchw:    (B, C, H, W)   float32
    conv_w:    (D, C, P, P)   PyTorch Conv2d weight layout
    conv_b:    (D,)
    class_emb: (1, D)
    pos_emb:   (N+1, D)
    returns:   (B, N+1, D) if trim else (B, n_pad, d_pad), dtype = out_dtype
    """
    B, C, H, W = x_nchw.shape
    if isinstance(patch_size, tuple):
        ph, pw = patch_size
    else:
        ph = pw = patch_size
    D = conv_w.shape[0]
    Nh, Nw = H // ph, W // pw
    N = Nh * Nw
    K = C * ph * pw
    S = N + 1                       # class token + patches

    # ---- padded / tiled sizes -------------------------------------------
    k_pad = _round_up(K, 128)       # lane-align the contraction dim
    d_pad = _round_up(D, 128)       # lane-dense weight columns & output

    if S <= 512:
        # Small-N path (e.g. ViT-B/16): one row tile, block over batch to grow
        # the MXU M dimension and amortise the per-step overhead.
        tn = _round_up(S, 8)
        n_pad = tn
        nt = 1
        bb = next(d for d in (4, 2, 1) if B % d == 0)
    else:
        # Long-sequence path: 512-row tiles (~85% of HBM roofline), bb = 1.
        tn = 512
        n_pad = _round_up(S, tn)
        nt = n_pad // tn
        bb = 1
    n_bblk = B // bb

    # ---- wrapper-side prep (one-time XLA ops) -----------------------------
    # Unfold NCHW -> (B, N, K) with the bf16 cast fused; prepend one zero row
    # (the "class patch": matmul contributes 0, the class embedding rides in
    # through row 0 of the positional table).
    patches = x_nchw.reshape(B, C, Nh, ph, Nw, pw)
    patches = patches.transpose(0, 2, 4, 1, 3, 5).reshape(B, N, K)
    patches = patches.astype(jnp.bfloat16)
    patches = jnp.pad(patches, ((0, 0), (1, n_pad - S), (0, k_pad - K)))

    w_mat = conv_w.reshape(D, K).T.astype(jnp.bfloat16)            # (K, D)
    w_mat = jnp.pad(w_mat, ((0, k_pad - K), (0, d_pad - D)))

    pos = pos_emb.reshape(S, D).astype(jnp.float32)
    pos_row0 = class_emb.reshape(1, D).astype(jnp.float32) + pos[0:1, :]
    pos_rest = pos[1:, :] + conv_b.reshape(1, D).astype(jnp.float32)
    pos_full = jnp.concatenate([pos_row0, pos_rest], axis=0)        # (S, D) f32
    pos_full = jnp.pad(pos_full, ((0, n_pad - S), (0, d_pad - D)))
    pos_full = pos_full.astype(jnp.bfloat16)                        # halve DMA

    # ---- VMEM budget (double-buffered streams, no hedge) -------------------
    out_isize = jnp.dtype(out_dtype).itemsize
    vmem_bytes = (2 * bb * tn * k_pad * 2          # patch tile (bf16) x2 bufs
                  + 2 * k_pad * d_pad * 2          # weight (bf16) x2 bufs
                  + 2 * tn * d_pad * 2             # pos tile (bf16) x2 bufs
                  + 2 * bb * tn * d_pad * out_isize)  # streamed output x2 bufs
    phys_vmem = _physical_vmem_bytes()
    vmem_limit = int(min(max(vmem_bytes + 8 * 1024 * 1024, 32 * 1024 * 1024),
                         phys_vmem - 8 * 1024 * 1024))

    # Grid: row-tiles OUTER, batch-blocks INNER -> the weight and the pos tile
    # have block indices constant across the inner axis and are only DMA'd nt
    # times total (not nt*B times).
    # TODO(synk): pipeline_mode=pl.Buffered(1) on the weight spec would shave
    # one weight buffer off VMEM; left at the default to keep lowering simple.
    out = pl.pallas_call(
        _data_embeddings_kernel,
        out_shape=jax.ShapeDtypeStruct((B, n_pad, d_pad), out_dtype),
        grid_spec=pltpu.PrefetchScalarGridSpec(
            num_scalar_prefetch=0,
            grid=(nt, n_bblk),
            in_specs=[
                pl.BlockSpec((bb, tn, k_pad), lambda j, b: (b, j, 0)),  # patches
                pl.BlockSpec((k_pad, d_pad), lambda j, b: (0, 0)),      # weight
                pl.BlockSpec((tn, d_pad), lambda j, b: (j, 0)),         # pos table
            ],
            out_specs=pl.BlockSpec((bb, tn, d_pad), lambda j, b: (b, j, 0)),
        ),
        compiler_params=pltpu.CompilerParams(
            dimension_semantics=("parallel", "parallel"),
            vmem_limit_bytes=vmem_limit,
        ),
    )(patches, w_mat, pos_full)

    if trim and (n_pad != S or d_pad != D):
        # NOTE: this slice is an extra HBM read+write; fused pipelines should
        # pass trim=False and mask the padded rows/cols downstream.
        out = out[:, :S, :D]
    return out


def _reference(x_nchw, conv_w, conv_b, class_emb, pos_emb, patch_size):
    """Pure-JAX f32 reference of the PyTorch forward (for verification)."""
    B, C, H, W = x_nchw.shape
    P = patch_size
    D = conv_w.shape[0]
    Nh, Nw = H // P, W // P
    N = Nh * Nw
    patches = x_nchw.reshape(B, C, Nh, P, Nw, P).transpose(0, 2, 4, 1, 3, 5)
    patches = patches.reshape(B, N, C * P * P)
    emb = jnp.einsum("bnk,dk->bnd", patches, conv_w.reshape(D, -1)) + conv_b
    cls = jnp.broadcast_to(class_emb.reshape(1, 1, D), (B, 1, D))
    out = jnp.concatenate([cls, emb], axis=1)
    return out + pos_emb[None, :, :]


if __name__ == "__main__":
    # Small ViT-ish config: 16x16 image, 4x4 patches -> 16 patches.
    B, C, H, W = 2, 4, 16, 16
    P = 4
    N = (H // P) * (W // P)          # 16
    D = 32                           # embed_dims

    key = jax.random.PRNGKey(0)
    kx, kw, kb, kc, kp = jax.random.split(key, 5)

    x = jax.random.normal(kx, (B, C, H, W), dtype=jnp.float32)
    conv_w = jax.random.normal(kw, (D, C, P, P), dtype=jnp.float32) * 0.05
    conv_b = jax.random.normal(kb, (D,), dtype=jnp.float32) * 0.05
    class_emb = jax.random.normal(kc, (1, D), dtype=jnp.float32)
    pos_emb = jax.random.normal(kp, (N + 1, D), dtype=jnp.float32)

    out = data_embeddings(x, conv_w, conv_b, class_emb, pos_emb, patch_size=P)
    out = jax.block_until_ready(out)

    ref = _reference(x, conv_w, conv_b, class_emb, pos_emb, P)
    assert out.shape == (B, N + 1, D), out.shape
    # bf16 matmul operands + bf16 positional table -> relaxed tolerance vs the
    # f32 reference (errors are ~1e-2 at these O(1) value scales).
    max_err = float(jnp.max(jnp.abs(out - ref)))
    assert jnp.allclose(out, ref, atol=3e-2, rtol=3e-2), f"mismatch, max_err={max_err}"

    print("KERNEL_OK")
</pallas_src>

<mosaic_0001>
module attributes {stable_mosaic.version = 11 : i64} {
  func.func @_data_embeddings_kernel(%arg0: i32, %arg1: i32, %arg2: memref<2x24x128xbf16, #tpu.memory_space<vmem>>, %arg3: memref<128x128xbf16, #tpu.memory_space<vmem>>, %arg4: memref<24x128xbf16, #tpu.memory_space<vmem>>, %arg5: memref<2x24x128xf32, #tpu.memory_space<vmem>>) attributes {dimension_semantics = [#tpu.dimension_semantics<parallel>, #tpu.dimension_semantics<parallel>], iteration_bounds = array<i64: 1, 1>, scalar_prefetch = 0 : i64, scratch_operands = 0 : i64, tpu.core_type = #tpu.core_type<tc>, window_params = [{transform_indices = @transform_0, window_bounds = array<i64: 2, 24, 128>}, {pipeline_mode = #tpu.pipeline_mode<synchronous>, transform_indices = @transform_1, window_bounds = array<i64: 128, 128>}, {transform_indices = @transform_2, window_bounds = array<i64: 24, 128>}, {transform_indices = @transform_3, window_bounds = array<i64: 2, 24, 128>}]} {
    %c0 = arith.constant 0 : index
    %c0_0 = arith.constant 0 : index
    %c0_1 = arith.constant 0 : index
    %0 = vector.load %arg2[%c0, %c0_0, %c0_1] : memref<2x24x128xbf16, #tpu.memory_space<vmem>>, vector<2x24x128xbf16>
    %1 = vector.shape_cast %0 : vector<2x24x128xbf16> to vector<48x128xbf16>
    %c0_2 = arith.constant 0 : index
    %c0_3 = arith.constant 0 : index
    %2 = vector.load %arg3[%c0_2, %c0_3] : memref<128x128xbf16, #tpu.memory_space<vmem>>, vector<128x128xbf16>
    %cst = arith.constant dense<0.000000e+00> : vector<48x128xf32>
    %3 = tpu.matmul %1, %2, %cst {dimension_numbers = #tpu.dot_dimension_numbers<[1], [0], [0], [1], [0, 0, 1, 1], [], []>} : vector<48x128xbf16>, vector<128x128xbf16>, vector<48x128xf32> -> vector<48x128xf32>
    %c0_4 = arith.constant 0 : index
    %c0_5 = arith.constant 0 : index
    %4 = vector.load %arg4[%c0_4, %c0_5] : memref<24x128xbf16, #tpu.memory_space<vmem>>, vector<24x128xbf16>
    %5 = arith.extf %4 : vector<24x128xbf16> to vector<24x128xf32>
    %6 = vector.shape_cast %3 : vector<48x128xf32> to vector<2x24x128xf32>
    %7 = vector.shape_cast %5 : vector<24x128xf32> to vector<1x24x128xf32>
    %8 = vector.broadcast %7 : vector<1x24x128xf32> to vector<2x24x128xf32>
    %9 = arith.addf %6, %8 : vector<2x24x128xf32>
    %c0_6 = arith.constant 0 : index
    %c0_7 = arith.constant 0 : index
    %c0_8 = arith.constant 0 : index
    %10 = vector.load %arg5[%c0_6, %c0_7, %c0_8] : memref<2x24x128xf32, #tpu.memory_space<vmem>>, vector<2x24x128xf32>
    tpu.vector_store %arg5[%c0_6, %c0_7, %c0_8], %9 {strides = array<i32>} : memref<2x24x128xf32, #tpu.memory_space<vmem>>, vector<2x24x128xf32>,
    return
  }
  func.func @transform_0(%arg0: i32, %arg1: i32) -> (i32, i32, i32) {
    %c0_i32 = arith.constant 0 : i32
    %c0_i32_0 = arith.constant 0 : i32
    return %arg1, %arg0, %c0_i32 : i32, i32, i32
  }
  func.func @transform_1(%arg0: i32, %arg1: i32) -> (i32, i32) {
    %c0_i32 = arith.constant 0 : i32
    %c0_i32_0 = arith.constant 0 : i32
    %c0_i32_1 = arith.constant 0 : i32
    return %c0_i32, %c0_i32_0 : i32, i32
  }
  func.func @transform_2(%arg0: i32, %arg1: i32) -> (i32, i32) {
    %c0_i32 = arith.constant 0 : i32
    %c0_i32_0 = arith.constant 0 : i32
    return %arg0, %c0_i32 : i32, i32
  }
  func.func @transform_3(%arg0: i32, %arg1: i32) -> (i32, i32, i32) {
    %c0_i32 = arith.constant 0 : i32
    %c0_i32_0 = arith.constant 0 : i32
    return %arg1, %arg0, %c0_i32 : i32, i32, i32
  }
}

</mosaic_0001>

<llo_original>
// kernel: data_embeddings.1
$region0: #{data_embeddings.1}
  #allocation0 [shape = 'u32[]', space=smem, size = 0x4, offset = 0x4, fixed_abs, tag = 'smem constant byte address 0x4 - core index']
  #allocation1 [shape = 'u32[72,128]{1,0:T(1,128)}', space=vmem, size = 0x9000, scoped, tag = 'internal scratch']
  %s0 = inlined_call_operand.vmem [shape: bf16[2,24,128], index: 0, kind: input, shape index: {}]
  %s1 = inlined_call_operand.vmem [shape: bf16[128,128], index: 1, kind: input, shape index: {}]
  %s2 = inlined_call_operand.vmem [shape: bf16[24,128], index: 2, kind: input, shape index: {}]
  %s3 = inlined_call_operand.vmem [shape: f32[2,24,128], index: 3, kind: output, shape index: {}]
  %s4 = sld [smem:[#allocation0]]
  $region22: #{data_embeddings.1} parent=0
    _
  %s6 = ssub.s32 1, %s4
  %s7 = scalar_select 0, %s6, %s4
  // Predicated region
  $region2: #{data_embeddings.1} parent=0 // pred_check
    _
  $region3: #{data_embeddings.1} parent=0 // pred_check_branch
    %9 = sbr.rel (0) target = $region5
  $region4: #{data_embeddings.1} parent=0 // pred_region
    _
  $region5: #{data_embeddings.1} parent=0 // pred_fallthru
    _
  // Predicated region
  $region6: #{data_embeddings.1} parent=0 // pred_check
    _
  $region7: #{data_embeddings.1} parent=0 // pred_check_branch
    %11 = sbr.rel (0) target = $region9
  $region8: #{data_embeddings.1} parent=0 // pred_region
    _
  $region9: #{data_embeddings.1} parent=0 // pred_fallthru
    _
  // Predicated region
  $region10: #{data_embeddings.1} parent=0 // pred_check
    _
  $region11: #{data_embeddings.1} parent=0 // pred_check_branch
    %13 = sbr.rel (0) target = $region13
  $region12: #{data_embeddings.1} parent=0 // pred_region
    _
  $region13: #{data_embeddings.1} parent=0 // pred_fallthru
    _
  %v14 = vld [vmem:[%s0] sm:$0xf]
  %v15 = vld [vmem:[%s0 + $0x4] sm:$0xf]
  %v16 = vld [vmem:[%s0 + $0x8] sm:$0xf]
  %v17 = vld [vmem:[%s0 + $0xc] sm:$0xf]
  %v18 = vld [vmem:[%s0 + $0x10] sm:$0xf]
  %v19 = vld [vmem:[%s0 + $0x14] sm:$0xf]
  %v20 = vld [vmem:[%s1] sm:$0xf]
  %v21 = vld [vmem:[%s1 + $0x4] sm:$0xf]
  %v22 = vld [vmem:[%s1 + $0x8] sm:$0xf]
  %v23 = vld [vmem:[%s1 + $0xc] sm:$0xf]
  %v24 = vld [vmem:[%s1 + $0x10] sm:$0xf]
  %v25 = vld [vmem:[%s1 + $0x14] sm:$0xf]
  %v26 = vld [vmem:[%s1 + $0x18] sm:$0xf]
  %v27 = vld [vmem:[%s1 + $0x1c] sm:$0xf]
  %v28 = vld [vmem:[%s1 + $0x20] sm:$0xf]
  %v29 = vld [vmem:[%s1 + $0x24] sm:$0xf]
  %v30 = vld [vmem:[%s1 + $0x28] sm:$0xf]
  %v31 = vld [vmem:[%s1 + $0x2c] sm:$0xf]
  %v32 = vld [vmem:[%s1 + $0x30] sm:$0xf]
  %v33 = vld [vmem:[%s1 + $0x34] sm:$0xf]
  %v34 = vld [vmem:[%s1 + $0x38] sm:$0xf]
  %v35 = vld [vmem:[%s1 + $0x3c] sm:$0xf]
  %v42 = vunpack.c.l.b16 %v14
  %v43 = vunpack.c.l.b16 %v15
  %v44 = vunpack.c.l.b16 %v16
  %v45 = vunpack.c.l.b16 %v17
  %v46 = vunpack.c.l.b16 %v18
  %v47 = vunpack.c.l.b16 %v19
  %v48 = vpack.c.b16 %v43, %v42
  %v49 = vpack.c.b16 %v45, %v44
  %v50 = vpack.c.b16 %v47, %v46
  %v70 = vunpack.c.l.b16 %v20
  %v71 = vunpack.c.l.b16 %v21
  %v72 = vunpack.c.l.b16 %v22
  %v73 = vunpack.c.l.b16 %v23
  %v74 = vunpack.c.l.b16 %v24
  %v75 = vunpack.c.l.b16 %v25
  %v76 = vunpack.c.l.b16 %v26
  %v77 = vunpack.c.l.b16 %v27
  %v78 = vunpack.c.l.b16 %v28
  %v79 = vunpack.c.l.b16 %v29
  %v80 = vunpack.c.l.b16 %v30
  %v81 = vunpack.c.l.b16 %v31
  %v82 = vunpack.c.l.b16 %v32
  %v83 = vunpack.c.l.b16 %v33
  %v84 = vunpack.c.l.b16 %v34
  %v85 = vunpack.c.l.b16 %v35
  %v86 = vpack.c.b16 %v71, %v70
  %v87 = vpack.c.b16 %v73, %v72
  %v88 = vpack.c.b16 %v75, %v74
  %v89 = vpack.c.b16 %v77, %v76
  %v90 = vpack.c.b16 %v79, %v78
  %v91 = vpack.c.b16 %v81, %v80
  %v92 = vpack.c.b16 %v83, %v82
  %v93 = vpack.c.b16 %v85, %v84
  %102 = vmatpush.bf16.msra.mxu0 %v93
  %103 = vmatpush.bf16.msra.mxu0 %v92
  %104 = vmatpush.bf16.msra.mxu0 %v91
  %105 = vmatpush.bf16.msra.mxu0 %v90
  %106 = vmatpush.bf16.msra.mxu0 %v89
  %107 = vmatpush.bf16.msra.mxu0 %v88
  %108 = vmatpush.bf16.msra.mxu0 %v87
  %109 = vmatpush.bf16.msra.mxu0 %v86
  %110 = vmatmul.bf16.gmra.mxu0 %v48
  %v111 = vpop.f32.mrf.mxu0
  %v112 = vadd.f32 0.0, %v111
  %v113 = vpop.f32.mrf.mxu0
  %v114 = vadd.f32 0.0, %v113
  %115 = vmatmul.bf16.gmra.mxu0 %v49
  %v116 = vpop.f32.mrf.mxu0
  %v117 = vadd.f32 0.0, %v116
  %v118 = vpop.f32.mrf.mxu0
  %v119 = vadd.f32 0.0, %v118
  %120 = vmatmul.bf16.gmra.mxu0 %v50
  %v121 = vpop.f32.mrf.mxu0
  %v122 = vadd.f32 0.0, %v121
  %v123 = vpop.f32.mrf.mxu0
  %v124 = vadd.f32 0.0, %v123
  %125 = vdwg.mxu0
  %v126 = vld [vmem:[%s2] sm:$0xf]
  %v127 = vld [vmem:[%s2 + $0x4] sm:$0xf]
  %v128 = vld [vmem:[%s2 + $0x8] sm:$0xf]
  %v129 = vunpack.c.l.bf16 %v126
  %v130 = vunpack.c.l.bf16 %v127
  %v131 = vunpack.c.l.bf16 %v128
  %v132 = vadd.f32 %v112, %v129
  %v133 = vadd.f32 %v114, %v130
  %v134 = vadd.f32 %v117, %v131
  %v135 = vadd.f32 %v119, %v129
  %v136 = vadd.f32 %v122, %v130
  %v137 = vadd.f32 %v124, %v131
  %138 = vst [vmem:[%s3] sm:$0xff] %v132
  %139 = vst [vmem:[%s3 + $0x8] sm:$0xff] %v133
  %140 = vst [vmem:[%s3 + $0x10] sm:$0xff] %v134
  %141 = vst [vmem:[%s3 + $0x18] sm:$0xff] %v135
  %142 = vst [vmem:[%s3 + $0x20] sm:$0xff] %v136
  %143 = vst [vmem:[%s3 + $0x28] sm:$0xff] %v137
  // Predicated region
  $region14: #{data_embeddings.1} parent=0 // pred_check
    _
  $region15: #{data_embeddings.1} parent=0 // pred_check_branch
    %145 = sbr.rel (0) target = $region17
  $region16: #{data_embeddings.1} parent=0 // pred_region
    _
  $region17: #{data_embeddings.1} parent=0 // pred_fallthru
    _
  // Predicated region
  $region18: #{data_embeddings.1} parent=0 // pred_check
    _
  $region19: #{data_embeddings.1} parent=0 // pred_check_branch
    %147 = sbr.rel (0) target = $region21
  $region20: #{data_embeddings.1} parent=0 // pred_region
    _
  $region21: #{data_embeddings.1} parent=0 // pred_fallthru
    _

</llo_original>
